<compile_context>
chip_gen: v5e
topology: v5e:2x2
jax: 0.10.0
libtpu: 0.0.40
codegen_flags: <defaults>
</compile_context>

<pallas_src>
import math

import jax
import jax.numpy as jnp
from jax.experimental import pallas as pl
from jax.experimental.pallas import tpu as pltpu


# ----------------------------- Pallas kernels ------------------------------


def _complex_linear_kernel(xr_ref, xi_ref, wre_ref, wim_ref, bre_ref, bim_ref,
                           outr_ref, outi_ref, accr_ref, acci_ref):
    k = pl.program_id(2)

    @pl.when(k == 0)
    def _():
        accr_ref[...] = jnp.zeros_like(accr_ref)
        acci_ref[...] = jnp.zeros_like(acci_ref)

    xr = xr_ref[...]
    xi = xi_ref[...]
    wre = wre_ref[...]
    wim = wim_ref[...]

    # Gauss / Karatsuba complex multiply: 3 MXU matmuls instead of 4.
    rr = jnp.dot(xr, wre, preferred_element_type=jnp.float32)          # xr @ Wre
    ii = jnp.dot(xi, wim, preferred_element_type=jnp.float32)          # xi @ Wim
    s = jnp.dot(xr + xi, wre + wim, preferred_element_type=jnp.float32)

    accr_ref[...] += rr - ii                # real partial:  xr@Wre - xi@Wim
    acci_ref[...] += s - rr - ii            # imag partial:  xi@Wre + xr@Wim

    @pl.when(k == pl.num_programs(2) - 1)
    def _():
        bre = bre_ref[...]                  # (1, TN) -- resident per N column
        bim = bim_ref[...]
        outr_ref[...] = (accr_ref[...] + (bre - bim)).astype(outr_ref.dtype)
        outi_ref[...] = (acci_ref[...] + (bre + bim)).astype(outi_ref.dtype)


def _real_linear_kernel(x_ref, w_ref, b_ref, out_ref, acc_ref):
    k = pl.program_id(2)

    @pl.when(k == 0)
    def _():
        acc_ref[...] = jnp.zeros_like(acc_ref)

    acc_ref[...] += jnp.dot(x_ref[...], w_ref[...],
                            preferred_element_type=jnp.float32)

    @pl.when(k == pl.num_programs(2) - 1)
    def _():
        out_ref[...] = (acc_ref[...] + b_ref[...]).astype(out_ref.dtype)


# ------------------------------- helpers ------------------------------------


def _round_up(x, m):
    return ((x + m - 1) // m) * m


def _pad2d(a, rows, cols):
    pr, pc = rows - a.shape[0], cols - a.shape[1]
    if pr == 0 and pc == 0:
        return a
    return jnp.pad(a, ((0, pr), (0, pc)))


def _tiles(M, N, K, tm, tn, tk):
    TM = min(tm, _round_up(M, 8))       # sublane-aligned
    TN = min(tn, _round_up(N, 128))     # lane-dense output tiles
    TK = min(tk, _round_up(K, 128))
    return TM, TN, TK, _round_up(M, TM), _round_up(N, TN), _round_up(K, TK)


_COMPILER_PARAMS = pltpu.CompilerParams(
    dimension_semantics=("parallel", "parallel", "arbitrary"),
    vmem_limit_bytes=48 * 1024 * 1024,
)


# ------------------------------ JAX wrappers -------------------------------


def complex_linear_split(xr, xi, params, *, tm=512, tn=512, tk=512,
                         compute_dtype=jnp.float32):
    """Complex path on pre-split real/imag parts (avoids de/re-interleave)."""
    lead = xr.shape[:-1]
    K = xr.shape[-1]
    w_re, b_re, w_im, b_im = (params["w_re"], params["b_re"],
                              params["w_im"], params["b_im"])
    N = w_re.shape[1]

    xr2 = xr.reshape(-1, K)
    xi2 = xi.reshape(-1, K)
    M = xr2.shape[0]

    TM, TN, TK, Mp, Np, Kp = _tiles(M, N, K, tm, tn, tk)

    xr_p = _pad2d(xr2.astype(compute_dtype), Mp, Kp)
    xi_p = _pad2d(xi2.astype(compute_dtype), Mp, Kp)
    wre_p = _pad2d(w_re.astype(compute_dtype), Kp, Np)
    wim_p = _pad2d(w_im.astype(compute_dtype), Kp, Np)
    bre_p = _pad2d(b_re.astype(jnp.float32), 1, Np)
    bim_p = _pad2d(b_im.astype(jnp.float32), 1, Np)

    grid = (Np // TN, Mp // TM, Kp // TK)   # N outer, M middle, K reduction last

    out_r, out_i = pl.pallas_call(
        _complex_linear_kernel,
        out_shape=(jax.ShapeDtypeStruct((Mp, Np), jnp.float32),
                   jax.ShapeDtypeStruct((Mp, Np), jnp.float32)),
        grid_spec=pltpu.PrefetchScalarGridSpec(
            num_scalar_prefetch=0,
            grid=grid,
            in_specs=[
                pl.BlockSpec((TM, TK), lambda j, i, k: (i, k)),   # xr
                pl.BlockSpec((TM, TK), lambda j, i, k: (i, k)),   # xi
                pl.BlockSpec((TK, TN), lambda j, i, k: (k, j)),   # W_re (resident across i)
                pl.BlockSpec((TK, TN), lambda j, i, k: (k, j)),   # W_im (resident across i)
                pl.BlockSpec((1, TN), lambda j, i, k: (0, j)),    # b_re (resident across i,k)
                pl.BlockSpec((1, TN), lambda j, i, k: (0, j)),    # b_im
            ],
            out_specs=(
                pl.BlockSpec((TM, TN), lambda j, i, k: (i, j)),
                pl.BlockSpec((TM, TN), lambda j, i, k: (i, j)),
            ),
            scratch_shapes=[pltpu.VMEM((TM, TN), jnp.float32),
                            pltpu.VMEM((TM, TN), jnp.float32)],
        ),
        compiler_params=_COMPILER_PARAMS,
    )(xr_p, xi_p, wre_p, wim_p, bre_p, bim_p)

    out_r = out_r[:M, :N].reshape(*lead, N)
    out_i = out_i[:M, :N].reshape(*lead, N)
    return out_r, out_i


def real_linear(x, params, *, tm=512, tn=512, tk=512,
                compute_dtype=jnp.float32):
    """Plain linear layer (complex_valued=False path)."""
    lead = x.shape[:-1]
    K = x.shape[-1]
    w, b = params["w"], params["b"]
    N = w.shape[1]

    x2 = x.reshape(-1, K)
    M = x2.shape[0]

    TM, TN, TK, Mp, Np, Kp = _tiles(M, N, K, tm, tn, tk)

    x_p = _pad2d(x2.astype(compute_dtype), Mp, Kp)
    w_p = _pad2d(w.astype(compute_dtype), Kp, Np)
    b_p = _pad2d(b.astype(jnp.float32), 1, Np)

    grid = (Np // TN, Mp // TM, Kp // TK)

    out = pl.pallas_call(
        _real_linear_kernel,
        out_shape=jax.ShapeDtypeStruct((Mp, Np), jnp.float32),
        grid_spec=pltpu.PrefetchScalarGridSpec(
            num_scalar_prefetch=0,
            grid=grid,
            in_specs=[
                pl.BlockSpec((TM, TK), lambda j, i, k: (i, k)),
                pl.BlockSpec((TK, TN), lambda j, i, k: (k, j)),
                pl.BlockSpec((1, TN), lambda j, i, k: (0, j)),
            ],
            out_specs=pl.BlockSpec((TM, TN), lambda j, i, k: (i, j)),
            scratch_shapes=[pltpu.VMEM((TM, TN), jnp.float32)],
        ),
        compiler_params=_COMPILER_PARAMS,
    )(x_p, w_p, b_p)

    return out[:M, :N].reshape(*lead, N)


def complex_linear(x, params, complex_valued, **kw):
    """Drop-in mirror of ComplexLinear.forward on a (possibly complex) x."""
    if complex_valued:
        # NOTE: jnp.real/jnp.imag + lax.complex each add a full HBM pass; use
        # complex_linear_split directly inside a fused pipeline when possible.
        out_r, out_i = complex_linear_split(
            jnp.real(x).astype(jnp.float32),
            jnp.imag(x).astype(jnp.float32),
            params, **kw)
        return jax.lax.complex(out_r, out_i)
    return real_linear(x, params, **kw)


def init_params(key, input_dim, output_dim, complex_valued):
    """Deterministic init mimicking nn.Linear defaults (U(-1/sqrt(in), 1/sqrt(in)))."""
    bound = 1.0 / math.sqrt(input_dim)

    def one_linear(k):
        kw, kb = jax.random.split(k)
        # stored transposed: (input_dim, output_dim)
        w = jax.random.uniform(kw, (input_dim, output_dim), jnp.float32,
                               -bound, bound)
        b = jax.random.uniform(kb, (1, output_dim), jnp.float32, -bound, bound)
        return w, b

    if complex_valued:
        k1, k2 = jax.random.split(key)
        w_re, b_re = one_linear(k1)
        w_im, b_im = one_linear(k2)
        return {"w_re": w_re, "b_re": b_re, "w_im": w_im, "b_im": b_im}
    w, b = one_linear(key)
    return {"w": w, "b": b}


# --------------------------------- main -------------------------------------


if __name__ == "__main__":
    # NOTE: at these demo shapes (M=16, K=N=32) the launch/DMA overhead
    # dominates and XLA fusion would beat a Pallas call; the tiling above is
    # sized for realistic backbone dimensions.
    key = jax.random.PRNGKey(0)
    k_params_c, k_params_r, k_xr, k_xi = jax.random.split(key, 4)

    batch, seq, input_dim, output_dim = 2, 8, 32, 32

    # ---- complex-valued case ----
    params_c = init_params(k_params_c, input_dim, output_dim, complex_valued=True)
    x_real = jax.random.normal(k_xr, (batch, seq, input_dim), jnp.float32)
    x_imag = jax.random.normal(k_xi, (batch, seq, input_dim), jnp.float32)

    def lin(x, w, b):
        return x @ w + b[0]

    ref_r = (lin(x_real, params_c["w_re"], params_c["b_re"])
             - lin(x_imag, params_c["w_im"], params_c["b_im"]))
    ref_i = (lin(x_imag, params_c["w_re"], params_c["b_re"])
             + lin(x_real, params_c["w_im"], params_c["b_im"]))

    # split path (no de/re-interleave passes)
    out_r, out_i = complex_linear_split(x_real, x_imag, params_c)
    out_r, out_i = jax.block_until_ready((out_r, out_i))
    assert out_r.shape == (batch, seq, output_dim)
    assert jnp.allclose(out_r, ref_r, atol=1e-4, rtol=1e-4)
    assert jnp.allclose(out_i, ref_i, atol=1e-4, rtol=1e-4)

    # convenience wrapper matching the nn.Module signature
    x_c = jax.lax.complex(x_real, x_imag)
    out_c = jax.block_until_ready(complex_linear(x_c, params_c, complex_valued=True))
    ref_c = jax.lax.complex(ref_r, ref_i)
    assert out_c.shape == (batch, seq, output_dim)
    assert jnp.allclose(out_c, ref_c, atol=1e-4, rtol=1e-4)

    # ---- real-valued case ----
    params_r = init_params(k_params_r, input_dim, output_dim, complex_valued=False)
    out_lin = jax.block_until_ready(complex_linear(x_real, params_r, complex_valued=False))
    ref_lin = lin(x_real, params_r["w"], params_r["b"])
    assert out_lin.shape == (batch, seq, output_dim)
    assert jnp.allclose(out_lin, ref_lin, atol=1e-4, rtol=1e-4)

    print("KERNEL_OK")
</pallas_src>

<mosaic_0001>
module attributes {stable_mosaic.version = 11 : i64} {
  func.func @_complex_linear_kernel(%arg0: i32, %arg1: i32, %arg2: i32, %arg3: memref<16x128xf32, #tpu.memory_space<vmem>>, %arg4: memref<16x128xf32, #tpu.memory_space<vmem>>, %arg5: memref<128x128xf32, #tpu.memory_space<vmem>>, %arg6: memref<128x128xf32, #tpu.memory_space<vmem>>, %arg7: memref<1x128xf32, #tpu.memory_space<vmem>>, %arg8: memref<1x128xf32, #tpu.memory_space<vmem>>, %arg9: memref<16x128xf32, #tpu.memory_space<vmem>>, %arg10: memref<16x128xf32, #tpu.memory_space<vmem>>, %arg11: memref<16x128xf32, #tpu.memory_space<vmem>>, %arg12: memref<16x128xf32, #tpu.memory_space<vmem>>) attributes {dimension_semantics = [#tpu.dimension_semantics<parallel>, #tpu.dimension_semantics<parallel>, #tpu.dimension_semantics<arbitrary>], iteration_bounds = array<i64: 1, 1, 1>, scalar_prefetch = 0 : i64, scratch_operands = 2 : i64, tpu.core_type = #tpu.core_type<tc>, window_params = [{transform_indices = @transform_0, window_bounds = array<i64: 16, 128>}, {transform_indices = @transform_1, window_bounds = array<i64: 16, 128>}, {transform_indices = @transform_2, window_bounds = array<i64: 128, 128>}, {transform_indices = @transform_3, window_bounds = array<i64: 128, 128>}, {transform_indices = @transform_4, window_bounds = array<i64: 1, 128>}, {transform_indices = @transform_5, window_bounds = array<i64: 1, 128>}, {transform_indices = @transform_6, window_bounds = array<i64: 16, 128>}, {transform_indices = @transform_7, window_bounds = array<i64: 16, 128>}]} {
    %c0_i32 = arith.constant 0 : i32
    %0 = arith.cmpi eq, %arg2, %c0_i32 : i32
    %1 = arith.extui %0 : i1 to i32
    %c0_i32_0 = arith.constant 0 : i32
    %2 = arith.cmpi ne, %1, %c0_i32_0 : i32
    scf.if %2 {
      %cst_20 = arith.constant 0.000000e+00 : f32
      %24 = vector.broadcast %cst_20 : f32 to vector<16x128xf32>
      %c0_21 = arith.constant 0 : index
      %c0_22 = arith.constant 0 : index
      %25 = vector.load %arg11[%c0_21, %c0_22] : memref<16x128xf32, #tpu.memory_space<vmem>>, vector<16x128xf32>
      tpu.vector_store %arg11[%c0_21, %c0_22], %24 {strides = array<i32>} : memref<16x128xf32, #tpu.memory_space<vmem>>, vector<16x128xf32>,
      %cst_23 = arith.constant 0.000000e+00 : f32
      %26 = vector.broadcast %cst_23 : f32 to vector<16x128xf32>
      %c0_24 = arith.constant 0 : index
      %c0_25 = arith.constant 0 : index
      %27 = vector.load %arg12[%c0_24, %c0_25] : memref<16x128xf32, #tpu.memory_space<vmem>>, vector<16x128xf32>
      tpu.vector_store %arg12[%c0_24, %c0_25], %26 {strides = array<i32>} : memref<16x128xf32, #tpu.memory_space<vmem>>, vector<16x128xf32>,
    } else {
    }
    %c0 = arith.constant 0 : index
    %c0_1 = arith.constant 0 : index
    %3 = vector.load %arg3[%c0, %c0_1] : memref<16x128xf32, #tpu.memory_space<vmem>>, vector<16x128xf32>
    %c0_2 = arith.constant 0 : index
    %c0_3 = arith.constant 0 : index
    %4 = vector.load %arg4[%c0_2, %c0_3] : memref<16x128xf32, #tpu.memory_space<vmem>>, vector<16x128xf32>
    %c0_4 = arith.constant 0 : index
    %c0_5 = arith.constant 0 : index
    %5 = vector.load %arg5[%c0_4, %c0_5] : memref<128x128xf32, #tpu.memory_space<vmem>>, vector<128x128xf32>
    %c0_6 = arith.constant 0 : index
    %c0_7 = arith.constant 0 : index
    %6 = vector.load %arg6[%c0_6, %c0_7] : memref<128x128xf32, #tpu.memory_space<vmem>>, vector<128x128xf32>
    %cst = arith.constant dense<0.000000e+00> : vector<16x128xf32>
    %7 = tpu.matmul %3, %5, %cst {dimension_numbers = #tpu.dot_dimension_numbers<[1], [0], [0], [1], [0, 0, 1, 1], [], []>} : vector<16x128xf32>, vector<128x128xf32>, vector<16x128xf32> -> vector<16x128xf32>
    %cst_8 = arith.constant dense<0.000000e+00> : vector<16x128xf32>
    %8 = tpu.matmul %4, %6, %cst_8 {dimension_numbers = #tpu.dot_dimension_numbers<[1], [0], [0], [1], [0, 0, 1, 1], [], []>} : vector<16x128xf32>, vector<128x128xf32>, vector<16x128xf32> -> vector<16x128xf32>
    %9 = arith.addf %3, %4 : vector<16x128xf32>
    %10 = arith.addf %5, %6 : vector<128x128xf32>
    %cst_9 = arith.constant dense<0.000000e+00> : vector<16x128xf32>
    %11 = tpu.matmul %9, %10, %cst_9 {dimension_numbers = #tpu.dot_dimension_numbers<[1], [0], [0], [1], [0, 0, 1, 1], [], []>} : vector<16x128xf32>, vector<128x128xf32>, vector<16x128xf32> -> vector<16x128xf32>
    %c0_10 = arith.constant 0 : index
    %c0_11 = arith.constant 0 : index
    %12 = vector.load %arg11[%c0_10, %c0_11] : memref<16x128xf32, #tpu.memory_space<vmem>>, vector<16x128xf32>
    %13 = arith.subf %7, %8 : vector<16x128xf32>
    %14 = arith.addf %12, %13 : vector<16x128xf32>
    %c0_12 = arith.constant 0 : index
    %c0_13 = arith.constant 0 : index
    %15 = vector.load %arg11[%c0_12, %c0_13] : memref<16x128xf32, #tpu.memory_space<vmem>>, vector<16x128xf32>
    tpu.vector_store %arg11[%c0_12, %c0_13], %14 {strides = array<i32>} : memref<16x128xf32, #tpu.memory_space<vmem>>, vector<16x128xf32>,
    %c0_14 = arith.constant 0 : index
    %c0_15 = arith.constant 0 : index
    %16 = vector.load %arg12[%c0_14, %c0_15] : memref<16x128xf32, #tpu.memory_space<vmem>>, vector<16x128xf32>
    %17 = arith.subf %11, %7 : vector<16x128xf32>
    %18 = arith.subf %17, %8 : vector<16x128xf32>
    %19 = arith.addf %16, %18 : vector<16x128xf32>
    %c0_16 = arith.constant 0 : index
    %c0_17 = arith.constant 0 : index
    %20 = vector.load %arg12[%c0_16, %c0_17] : memref<16x128xf32, #tpu.memory_space<vmem>>, vector<16x128xf32>
    tpu.vector_store %arg12[%c0_16, %c0_17], %19 {strides = array<i32>} : memref<16x128xf32, #tpu.memory_space<vmem>>, vector<16x128xf32>,
    %c0_i32_18 = arith.constant 0 : i32
    %21 = arith.cmpi eq, %arg2, %c0_i32_18 : i32
    %22 = arith.extui %21 : i1 to i32
    %c0_i32_19 = arith.constant 0 : i32
    %23 = arith.cmpi ne, %22, %c0_i32_19 : i32
    scf.if %23 {
      %c0_20 = arith.constant 0 : index
      %c0_21 = arith.constant 0 : index
      %24 = vector.load %arg7[%c0_20, %c0_21] : memref<1x128xf32, #tpu.memory_space<vmem>>, vector<1x128xf32>
      %c0_22 = arith.constant 0 : index
      %c0_23 = arith.constant 0 : index
      %25 = vector.load %arg8[%c0_22, %c0_23] : memref<1x128xf32, #tpu.memory_space<vmem>>, vector<1x128xf32>
      %c0_24 = arith.constant 0 : index
      %c0_25 = arith.constant 0 : index
      %26 = vector.load %arg11[%c0_24, %c0_25] : memref<16x128xf32, #tpu.memory_space<vmem>>, vector<16x128xf32>
      %27 = arith.subf %24, %25 : vector<1x128xf32>
      %28 = vector.broadcast %27 : vector<1x128xf32> to vector<16x128xf32>
      %29 = arith.addf %26, %28 : vector<16x128xf32>
      %c0_26 = arith.constant 0 : index
      %c0_27 = arith.constant 0 : index
      %30 = vector.load %arg9[%c0_26, %c0_27] : memref<16x128xf32, #tpu.memory_space<vmem>>, vector<16x128xf32>
      tpu.vector_store %arg9[%c0_26, %c0_27], %29 {strides = array<i32>} : memref<16x128xf32, #tpu.memory_space<vmem>>, vector<16x128xf32>,
      %c0_28 = arith.constant 0 : index
      %c0_29 = arith.constant 0 : index
      %31 = vector.load %arg12[%c0_28, %c0_29] : memref<16x128xf32, #tpu.memory_space<vmem>>, vector<16x128xf32>
      %32 = arith.addf %24, %25 : vector<1x128xf32>
      %33 = vector.broadcast %32 : vector<1x128xf32> to vector<16x128xf32>
      %34 = arith.addf %31, %33 : vector<16x128xf32>
      %c0_30 = arith.constant 0 : index
      %c0_31 = arith.constant 0 : index
      %35 = vector.load %arg10[%c0_30, %c0_31] : memref<16x128xf32, #tpu.memory_space<vmem>>, vector<16x128xf32>
      tpu.vector_store %arg10[%c0_30, %c0_31], %34 {strides = array<i32>} : memref<16x128xf32, #tpu.memory_space<vmem>>, vector<16x128xf32>,
    } else {
    }
    return
  }
  func.func @transform_0(%arg0: i32, %arg1: i32, %arg2: i32) -> (i32, i32) {
    %c0_i32 = arith.constant 0 : i32
    return %arg1, %arg2 : i32, i32
  }
  func.func @transform_1(%arg0: i32, %arg1: i32, %arg2: i32) -> (i32, i32) {
    %c0_i32 = arith.constant 0 : i32
    return %arg1, %arg2 : i32, i32
  }
  func.func @transform_2(%arg0: i32, %arg1: i32, %arg2: i32) -> (i32, i32) {
    %c0_i32 = arith.constant 0 : i32
    return %arg2, %arg0 : i32, i32
  }
  func.func @transform_3(%arg0: i32, %arg1: i32, %arg2: i32) -> (i32, i32) {
    %c0_i32 = arith.constant 0 : i32
    return %arg2, %arg0 : i32, i32
  }
  func.func @transform_4(%arg0: i32, %arg1: i32, %arg2: i32) -> (i32, i32) {
    %c0_i32 = arith.constant 0 : i32
    %c0_i32_0 = arith.constant 0 : i32
    return %c0_i32, %arg0 : i32, i32
  }
  func.func @transform_5(%arg0: i32, %arg1: i32, %arg2: i32) -> (i32, i32) {
    %c0_i32 = arith.constant 0 : i32
    %c0_i32_0 = arith.constant 0 : i32
    return %c0_i32, %arg0 : i32, i32
  }
  func.func @transform_6(%arg0: i32, %arg1: i32, %arg2: i32) -> (i32, i32) {
    %c0_i32 = arith.constant 0 : i32
    return %arg1, %arg0 : i32, i32
  }
  func.func @transform_7(%arg0: i32, %arg1: i32, %arg2: i32) -> (i32, i32) {
    %c0_i32 = arith.constant 0 : i32
    return %arg1, %arg0 : i32, i32
  }
}

</mosaic_0001>

<llo_original>
// kernel: tpu_custom_call.1
$region0: #{tpu_custom_call.1}
  #allocation0 [shape = 'u32[]', space=smem, size = 0x4, offset = 0x4, fixed_abs, tag = 'smem constant byte address 0x4 - core index']
  #allocation1 [shape = 'u32[72,128]{1,0:T(1,128)}', space=vmem, size = 0x9000, scoped, tag = 'internal scratch']
  #allocation2 [shape = 'f32[16,128]{1,0:T(8,128)}', space=vmem, size = 0x2000, scoped, tag = 'scratch operand']
  #allocation3 [shape = 'f32[16,128]{1,0:T(8,128)}', space=vmem, size = 0x2000, scoped, tag = 'scratch operand']
  %s0 = inlined_call_operand.hbm [shape: f32[16,128], index: 0, kind: input, shape index: {}]
  %s1 = inlined_call_operand.hbm [shape: f32[16,128], index: 1, kind: input, shape index: {}]
  %s2 = inlined_call_operand.hbm [shape: f32[128,128], index: 2, kind: input, shape index: {}]
  %s3 = inlined_call_operand.hbm [shape: f32[128,128], index: 3, kind: input, shape index: {}]
  %s4 = inlined_call_operand.vmem [shape: f32[1,128], index: 4, kind: input, shape index: {}]
  %s5 = inlined_call_operand.vmem [shape: f32[1,128], index: 5, kind: input, shape index: {}]
  %s6 = inlined_call_operand.hbm [shape: f32[16,128], index: 6, kind: output, shape index: {0}]
  %s7 = inlined_call_operand.hbm [shape: f32[16,128], index: 7, kind: output, shape index: {1}]
  %8 = xla_tuple %s6, %s7
  %s9 = sld [smem:[#allocation0]]
  $region66: #{tpu_custom_call.1} parent=0
    _
  %s11 = ssub.s32 1, %s9
  %s12 = scalar_select 0, %s11, %s9
  $region1: #{tpu_custom_call.1} parent=0
    #allocation4 [shape = 'u8[8192]{0}', space=vmem, size = 0x2000, scoped, tag = 'input window, operand 0, single buffered']
    #allocation5 [shape = 's32[1]{0}', space=sflag, size = 0x4, scoped, tag = 'scoped memory for tpu_custom_call.1']
    #allocation6 [shape = 's32[1]{0}', space=sflag, size = 0x4, scoped, tag = 'scoped memory for tpu_custom_call.1']
    #allocation7 [shape = 'u8[8192]{0}', space=vmem, size = 0x2000, scoped, tag = 'input window, operand 1, single buffered']
    #allocation8 [shape = 's32[1]{0}', space=sflag, size = 0x4, scoped, tag = 'scoped memory for tpu_custom_call.1']
    #allocation9 [shape = 'u8[65536]{0}', space=vmem, size = 0x10000, scoped, tag = 'input window, operand 2, single buffered']
    #allocation10 [shape = 'u8[65536]{0}', space=vmem, size = 0x10000, scoped, tag = 'input window, operand 3, single buffered']
    #allocation11 [shape = 's32[1]{0}', space=sflag, size = 0x4, scoped, tag = 'scoped memory for tpu_custom_call.1']
    #allocation12 [shape = 'u8[8192]{0}', space=vmem, size = 0x2000, scoped, tag = 'output window, operand 0, single buffered']
    #allocation13 [shape = 'u8[8192]{0}', space=vmem, size = 0x2000, scoped, tag = 'output window, operand 1, single buffered']
    #allocation14 [shape = 's32[1]{0}', space=sflag, size = 0x4, scoped, tag = 'scoped memory for tpu_custom_call.1']
    %13 = vsyncpa [#allocation5], 0
    %14 = vsyncpa [#allocation8], 0
    %15 = vsyncpa [#allocation11], 0
    %16 = vsyncpa [#allocation6], 0
    %17 = vsyncpa [#allocation14], 0
    // Predicated region
    $region2: #{tpu_custom_call.1} parent=1 // pred_check
      _
    $region3: #{tpu_custom_call.1} parent=1 // pred_check_branch
      %19 = sbr.rel (0) target = $region5
    $region4: #{tpu_custom_call.1} parent=1 // pred_region
      %21 = vsyncadd [#allocation5], 0
      %s22 = sshll.u32 %s0, 4
      %s23 = int_to_ptr.hbm [resolvable:$true] %s22
      %s24 = sshll.u32 [#allocation4], 4
      %s25 = int_to_ptr.vmem [resolvable:$true] %s24
      %30 = dma.hbm_to_vmem [thread:$0]  %s23, 256, %s25, [#allocation5], 128, 128, 8
    $region5: #{tpu_custom_call.1} parent=1 // pred_fallthru
      _
    // Predicated region
    $region6: #{tpu_custom_call.1} parent=1 // pred_check
      _
    $region7: #{tpu_custom_call.1} parent=1 // pred_check_branch
      %32 = sbr.rel (0) target = $region9
    $region8: #{tpu_custom_call.1} parent=1 // pred_region
      %34 = vsyncadd [#allocation8], 0
      %s35 = sshll.u32 %s1, 4
      %s36 = int_to_ptr.hbm [resolvable:$true] %s35
      %s37 = sshll.u32 [#allocation7], 4
      %s38 = int_to_ptr.vmem [resolvable:$true] %s37
      %43 = dma.hbm_to_vmem [thread:$0]  %s36, 256, %s38, [#allocation8], 128, 128, 8
    $region9: #{tpu_custom_call.1} parent=1 // pred_fallthru
      _
    // Predicated region
    $region10: #{tpu_custom_call.1} parent=1 // pred_check
      _
    $region11: #{tpu_custom_call.1} parent=1 // pred_check_branch
      %45 = sbr.rel (0) target = $region13
    $region12: #{tpu_custom_call.1} parent=1 // pred_region
      %47 = vsyncadd [#allocation8], 0
      %s48 = sshll.u32 %s2, 4
      %s49 = int_to_ptr.hbm [resolvable:$true] %s48
      %s50 = sshll.u32 [#allocation9], 4
      %s51 = int_to_ptr.vmem [resolvable:$true] %s50
      %56 = dma.hbm_to_vmem [thread:$0]  %s49, 2048, %s51, [#allocation8], 128, 128, 8
    $region13: #{tpu_custom_call.1} parent=1 // pred_fallthru
      _
    // Predicated region
    $region14: #{tpu_custom_call.1} parent=1 // pred_check
      _
    $region15: #{tpu_custom_call.1} parent=1 // pred_check_branch
      %58 = sbr.rel (0) target = $region17
    $region16: #{tpu_custom_call.1} parent=1 // pred_region
      %60 = vsyncadd [#allocation11], 0
      %s61 = sshll.u32 %s3, 4
      %s62 = int_to_ptr.hbm [resolvable:$true] %s61
      %s63 = sshll.u32 [#allocation10], 4
      %s64 = int_to_ptr.vmem [resolvable:$true] %s63
      %69 = dma.hbm_to_vmem [thread:$0]  %s62, 2048, %s64, [#allocation11], 128, 128, 8
    $region17: #{tpu_custom_call.1} parent=1 // pred_fallthru
      _
    // Predicated region
    $region18: #{tpu_custom_call.1} parent=1 // pred_check
      _
    $region19: #{tpu_custom_call.1} parent=1 // pred_check_branch
      %71 = sbr.rel (0) target = $region21
    $region20: #{tpu_custom_call.1} parent=1 // pred_region
      _
    $region21: #{tpu_custom_call.1} parent=1 // pred_fallthru
      _
    // Predicated region
    $region22: #{tpu_custom_call.1} parent=1 // pred_check
      _
    $region23: #{tpu_custom_call.1} parent=1 // pred_check_branch
      %73 = sbr.rel (0) target = $region25
    $region24: #{tpu_custom_call.1} parent=1 // pred_region
      _
    $region25: #{tpu_custom_call.1} parent=1 // pred_fallthru
      _
    // Predicated region
    $region26: #{tpu_custom_call.1} parent=1 // pred_check
      _
    $region27: #{tpu_custom_call.1} parent=1 // pred_check_branch
      %75 = sbr.rel (0) target = $region29
    $region28: #{tpu_custom_call.1} parent=1 // pred_region
      %77 = dma.done [#allocation5], 256
    $region29: #{tpu_custom_call.1} parent=1 // pred_fallthru
      _
    // Predicated region
    $region30: #{tpu_custom_call.1} parent=1 // pred_check
      _
    $region31: #{tpu_custom_call.1} parent=1 // pred_check_branch
      %79 = sbr.rel (0) target = $region33
    $region32: #{tpu_custom_call.1} parent=1 // pred_region
      %81 = dma.done [#allocation8], 256
    $region33: #{tpu_custom_call.1} parent=1 // pred_fallthru
      _
    // Predicated region
    $region34: #{tpu_custom_call.1} parent=1 // pred_check
      _
    $region35: #{tpu_custom_call.1} parent=1 // pred_check_branch
      %83 = sbr.rel (0) target = $region37
    $region36: #{tpu_custom_call.1} parent=1 // pred_region
      %85 = dma.done [#allocation8], 2048
    $region37: #{tpu_custom_call.1} parent=1 // pred_fallthru
      _
    // Predicated region
    $region38: #{tpu_custom_call.1} parent=1 // pred_check
      _
    $region39: #{tpu_custom_call.1} parent=1 // pred_check_branch
      %87 = sbr.rel (0) target = $region41
    $region40: #{tpu_custom_call.1} parent=1 // pred_region
      %89 = dma.done [#allocation11], 2048
    $region41: #{tpu_custom_call.1} parent=1 // pred_fallthru
      _
    %p90 = scmp.eq.s32.totalorder 0, 0
    // Predicated region
    $region42: #{tpu_custom_call.1} parent=1 // pred_check
      %p91 = pneg %p90
    $region43: #{tpu_custom_call.1} parent=1 // pred_check_branch
      %93 = sbr.rel (%p91) target = $region45
    $region44: #{tpu_custom_call.1} parent=1 // pred_region
      %94 = vst [vmem:[#allocation2] sm:$0xff] 0.0
      %95 = vst [vmem:[#allocation2 + $0x8] sm:$0xff] 0.0
      %96 = vst [vmem:[#allocation3] sm:$0xff] 0.0
      %97 = vst [vmem:[#allocation3 + $0x8] sm:$0xff] 0.0
    $region45: #{tpu_custom_call.1} parent=1 // pred_fallthru
      _
    %v98 = vld [vmem:[#allocation4] sm:$0xff]
    %v99 = vld [vmem:[#allocation4 + $0x8] sm:$0xff]
    %v100 = vld [vmem:[#allocation7] sm:$0xff]
    %v101 = vld [vmem:[#allocation7 + $0x8] sm:$0xff]
    %v102 = vld [vmem:[#allocation9] sm:$0xff]
    %v103 = vld [vmem:[#allocation9 + $0x8] sm:$0xff]
    %v104 = vld [vmem:[#allocation9 + $0x10] sm:$0xff]
    %v105 = vld [vmem:[#allocation9 + $0x18] sm:$0xff]
    %v106 = vld [vmem:[#allocation9 + $0x20] sm:$0xff]
    %v107 = vld [vmem:[#allocation9 + $0x28] sm:$0xff]
    %v108 = vld [vmem:[#allocation9 + $0x30] sm:$0xff]
    %v109 = vld [vmem:[#allocation9 + $0x38] sm:$0xff]
    %v110 = vld [vmem:[#allocation9 + $0x40] sm:$0xff]
    %v111 = vld [vmem:[#allocation9 + $0x48] sm:$0xff]
    %v112 = vld [vmem:[#allocation9 + $0x50] sm:$0xff]
    %v113 = vld [vmem:[#allocation9 + $0x58] sm:$0xff]
    %v114 = vld [vmem:[#allocation9 + $0x60] sm:$0xff]
    %v115 = vld [vmem:[#allocation9 + $0x68] sm:$0xff]
    %v116 = vld [vmem:[#allocation9 + $0x70] sm:$0xff]
    %v117 = vld [vmem:[#allocation9 + $0x78] sm:$0xff]
    %v118 = vld [vmem:[#allocation10] sm:$0xff]
    %v119 = vld [vmem:[#allocation10 + $0x8] sm:$0xff]
    %v120 = vld [vmem:[#allocation10 + $0x10] sm:$0xff]
    %v121 = vld [vmem:[#allocation10 + $0x18] sm:$0xff]
    %v122 = vld [vmem:[#allocation10 + $0x20] sm:$0xff]
    %v123 = vld [vmem:[#allocation10 + $0x28] sm:$0xff]
    %v124 = vld [vmem:[#allocation10 + $0x30] sm:$0xff]
    %v125 = vld [vmem:[#allocation10 + $0x38] sm:$0xff]
    %v126 = vld [vmem:[#allocation10 + $0x40] sm:$0xff]
    %v127 = vld [vmem:[#allocation10 + $0x48] sm:$0xff]
    %v128 = vld [vmem:[#allocation10 + $0x50] sm:$0xff]
    %v129 = vld [vmem:[#allocation10 + $0x58] sm:$0xff]
    %v130 = vld [vmem:[#allocation10 + $0x60] sm:$0xff]
    %v131 = vld [vmem:[#allocation10 + $0x68] sm:$0xff]
    %v132 = vld [vmem:[#allocation10 + $0x70] sm:$0xff]
    %v133 = vld [vmem:[#allocation10 + $0x78] sm:$0xff]
    %134 = vmatpush.msra.mxu0 %v117
    %135 = vmatpush.msra.mxu0 %v116
    %136 = vmatpush.msra.mxu0 %v115
    %137 = vmatpush.msra.mxu0 %v114
    %138 = vmatpush.msra.mxu0 %v113
    %139 = vmatpush.msra.mxu0 %v112
    %140 = vmatpush.msra.mxu0 %v111
    %141 = vmatpush.msra.mxu0 %v110
    %142 = vmatpush.msra.mxu0 %v109
    %143 = vmatpush.msra.mxu0 %v108
    %144 = vmatpush.msra.mxu0 %v107
    %145 = vmatpush.msra.mxu0 %v106
    %146 = vmatpush.msra.mxu0 %v105
    %147 = vmatpush.msra.mxu0 %v104
    %148 = vmatpush.msra.mxu0 %v103
    %149 = vmatpush.msra.mxu0 %v102
    %150 = vmatmul.f32.gmra.mxu0 %v98
    %v151 = vpop.f32.mrf.mxu0
    %v152 = vadd.f32 0.0, %v151
    %153 = vmatmul.f32.gmra.mxu0 %v99
    %v154 = vpop.f32.mrf.mxu0
    %v155 = vadd.f32 0.0, %v154
    %156 = vdwg.mxu0
    %157 = vmatpush.msra.mxu0 %v133
    %158 = vmatpush.msra.mxu0 %v132
    %159 = vmatpush.msra.mxu0 %v131
    %160 = vmatpush.msra.mxu0 %v130
    %161 = vmatpush.msra.mxu0 %v129
    %162 = vmatpush.msra.mxu0 %v128
    %163 = vmatpush.msra.mxu0 %v127
    %164 = vmatpush.msra.mxu0 %v126
    %165 = vmatpush.msra.mxu0 %v125
    %166 = vmatpush.msra.mxu0 %v124
    %167 = vmatpush.msra.mxu0 %v123
    %168 = vmatpush.msra.mxu0 %v122
    %169 = vmatpush.msra.mxu0 %v121
    %170 = vmatpush.msra.mxu0 %v120
    %171 = vmatpush.msra.mxu0 %v119
    %172 = vmatpush.msra.mxu0 %v118
    %173 = vmatmul.f32.gmra.mxu0 %v100
    %v174 = vpop.f32.mrf.mxu0
    %v175 = vadd.f32 0.0, %v174
    %176 = vmatmul.f32.gmra.mxu0 %v101
    %v177 = vpop.f32.mrf.mxu0
    %v178 = vadd.f32 0.0, %v177
    %179 = vdwg.mxu0
    %v180 = vadd.f32 %v98, %v100
    %v181 = vadd.f32 %v99, %v101
    %v182 = vadd.f32 %v102, %v118
    %v183 = vadd.f32 %v103, %v119
    %v184 = vadd.f32 %v104, %v120
    %v185 = vadd.f32 %v105, %v121
    %v186 = vadd.f32 %v106, %v122
    %v187 = vadd.f32 %v107, %v123
    %v188 = vadd.f32 %v108, %v124
    %v189 = vadd.f32 %v109, %v125
    %v190 = vadd.f32 %v110, %v126
    %v191 = vadd.f32 %v111, %v127
    %v192 = vadd.f32 %v112, %v128
    %v193 = vadd.f32 %v113, %v129
    %v194 = vadd.f32 %v114, %v130
    %v195 = vadd.f32 %v115, %v131
    %v196 = vadd.f32 %v116, %v132
    %v197 = vadd.f32 %v117, %v133
    %198 = vmatpush.msra.mxu0 %v197
    %199 = vmatpush.msra.mxu0 %v196
    %200 = vmatpush.msra.mxu0 %v195
    %201 = vmatpush.msra.mxu0 %v194
    %202 = vmatpush.msra.mxu0 %v193
    %203 = vmatpush.msra.mxu0 %v192
    %204 = vmatpush.msra.mxu0 %v191
    %205 = vmatpush.msra.mxu0 %v190
    %206 = vmatpush.msra.mxu0 %v189
    %207 = vmatpush.msra.mxu0 %v188
    %208 = vmatpush.msra.mxu0 %v187
    %209 = vmatpush.msra.mxu0 %v186
    %210 = vmatpush.msra.mxu0 %v185
    %211 = vmatpush.msra.mxu0 %v184
    %212 = vmatpush.msra.mxu0 %v183
    %213 = vmatpush.msra.mxu0 %v182
    %214 = vmatmul.f32.gmra.mxu0 %v180
    %v215 = vpop.f32.mrf.mxu0
    %v216 = vadd.f32 0.0, %v215
    %217 = vmatmul.f32.gmra.mxu0 %v181
    %v218 = vpop.f32.mrf.mxu0
    %v219 = vadd.f32 0.0, %v218
    %220 = vdwg.mxu0
    %v221 = vld [vmem:[#allocation2] sm:$0xff]
    %v222 = vld [vmem:[#allocation2 + $0x8] sm:$0xff]
    %v223 = vsub.f32 %v152, %v175
    %v224 = vsub.f32 %v155, %v178
    %v225 = vadd.f32 %v221, %v223
    %v226 = vadd.f32 %v222, %v224
    %227 = vst [vmem:[#allocation2] sm:$0xff] %v225
    %228 = vst [vmem:[#allocation2 + $0x8] sm:$0xff] %v226
    %v229 = vld [vmem:[#allocation3] sm:$0xff]
    %v230 = vld [vmem:[#allocation3 + $0x8] sm:$0xff]
    %v231 = vsub.f32 %v216, %v152
    %v232 = vsub.f32 %v219, %v155
    %v233 = vsub.f32 %v231, %v175
    %v234 = vsub.f32 %v232, %v178
    %v235 = vadd.f32 %v229, %v233
    %v236 = vadd.f32 %v230, %v234
    %237 = vst [vmem:[#allocation3] sm:$0xff] %v235
    %238 = vst [vmem:[#allocation3 + $0x8] sm:$0xff] %v236
    // Predicated region
    $region46: #{tpu_custom_call.1} parent=1 // pred_check
      %p239 = pneg %p90
    $region47: #{tpu_custom_call.1} parent=1 // pred_check_branch
      %241 = sbr.rel (%p239) target = $region49
    $region48: #{tpu_custom_call.1} parent=1 // pred_region
      %v242 = vld [vmem:[%s4] sm:$0x1]
      %v243 = vld [vmem:[%s5] sm:$0x1]
      %v244 = vld [vmem:[#allocation2] sm:$0xff]
      %v245 = vld [vmem:[#allocation2 + $0x8] sm:$0xff]
      %v246 = vsub.f32 %v242, %v243
      %v248 = vperm.slane %v246, 0
      %v250 = vadd.f32 %v244, %v248
      %v251 = vadd.f32 %v245, %v248
      %252 = vst [vmem:[#allocation12] sm:$0xff] %v250
      %253 = vst [vmem:[#allocation12 + $0x8] sm:$0xff] %v251
      %v254 = vld [vmem:[#allocation3] sm:$0xff]
      %v255 = vld [vmem:[#allocation3 + $0x8] sm:$0xff]
      %v256 = vadd.f32 %v242, %v243
      %v258 = vperm.slane %v256, 0
      %v260 = vadd.f32 %v254, %v258
      %v261 = vadd.f32 %v255, %v258
      %262 = vst [vmem:[#allocation13] sm:$0xff] %v260
      %263 = vst [vmem:[#allocation13 + $0x8] sm:$0xff] %v261
    $region49: #{tpu_custom_call.1} parent=1 // pred_fallthru
      _
    // Predicated region
    $region50: #{tpu_custom_call.1} parent=1 // pred_check
      _
    $region51: #{tpu_custom_call.1} parent=1 // pred_check_branch
      %265 = sbr.rel (0) target = $region53
    $region52: #{tpu_custom_call.1} parent=1 // pred_region
      %267 = vsyncadd [#allocation6], 0
      %s268 = sshll.u32 [#allocation12], 4
      %s269 = int_to_ptr.vmem [resolvable:$true] %s268
      %s270 = sshll.u32 %s6, 4
      %s271 = int_to_ptr.hbm [resolvable:$true] %s270
      %276 = dma.vmem_to_hbm [thread:$0]  %s269, 256, %s271, [#allocation6], 128, 128, 8
    $region53: #{tpu_custom_call.1} parent=1 // pred_fallthru
      _
    // Predicated region
    $region54: #{tpu_custom_call.1} parent=1 // pred_check
      _
    $region55: #{tpu_custom_call.1} parent=1 // pred_check_branch
      %278 = sbr.rel (0) target = $region57
    $region56: #{tpu_custom_call.1} parent=1 // pred_region
      %280 = vsyncadd [#allocation14], 0
      %s281 = sshll.u32 [#allocation13], 4
      %s282 = int_to_ptr.vmem [resolvable:$true] %s281
      %s283 = sshll.u32 %s7, 4
      %s284 = int_to_ptr.hbm [resolvable:$true] %s283
      %289 = dma.vmem_to_hbm [thread:$0]  %s282, 256, %s284, [#allocation14], 128, 128, 8
    $region57: #{tpu_custom_call.1} parent=1 // pred_fallthru
      _
    // Predicated region
    $region58: #{tpu_custom_call.1} parent=1 // pred_check
      _
    $region59: #{tpu_custom_call.1} parent=1 // pred_check_branch
      %291 = sbr.rel (0) target = $region61
    $region60: #{tpu_custom_call.1} parent=1 // pred_region
      %293 = dma.done [#allocation6], 256
    $region61: #{tpu_custom_call.1} parent=1 // pred_fallthru
      _
    // Predicated region
    $region62: #{tpu_custom_call.1} parent=1 // pred_check
      _
    $region63: #{tpu_custom_call.1} parent=1 // pred_check_branch
      %295 = sbr.rel (0) target = $region65
    $region64: #{tpu_custom_call.1} parent=1 // pred_region
      %297 = dma.done [#allocation14], 256
    $region65: #{tpu_custom_call.1} parent=1 // pred_fallthru
      _
    %298 = vsyncpa [#allocation5], 1
    %299 = vsyncpa [#allocation8], 1
    %300 = vsyncpa [#allocation11], 1
    %301 = vsyncpa [#allocation6], 1
    %302 = vsyncpa [#allocation14], 1

</llo_original>
